<compile_context>
chip_gen: v7x
topology: tpu7x:2x2x1
jax: 0.10.0
libtpu: 0.0.40
codegen_flags: <defaults>
</compile_context>

<pallas_src>
import jax
import jax.numpy as jnp
from jax.experimental import pallas as pl
from jax.experimental.pallas import tpu as pltpu


def _round_up(x, m):
    return ((x + m - 1) // m) * m


def _cdiv(a, b):
    return -(-a // b)


# ----------------------------------------------------------------------------
# Parameter packing: one (2 * L * Dmax, Dmax) f32 buffer.
#   rows [2*i*Dmax     : 2*i*Dmax + Dmax]  -> W_i^T  (dout x din, zero-padded)
#   rows [(2*i+1)*Dmax : (2*i+2)*Dmax]     -> b_i    in column 0, zero-padded
# Zero padding is mathematically inert (padded rows of h stay exactly 0).
# ----------------------------------------------------------------------------
def _layout_dims(layersizes, out_size):
    dims = list(layersizes) + [out_size]
    Dmax = _round_up(max(dims), 8)
    return dims, Dmax


def pack_params(params, layersizes, out_size):
    dims, Dmax = _layout_dims(layersizes, out_size)
    n_layers = len(dims) - 1
    buf = jnp.zeros((2 * n_layers * Dmax, Dmax), jnp.float32)
    for i, (w, b) in enumerate(params):          # w: (din, dout), b: (1, dout)
        din, dout = dims[i], dims[i + 1]
        r = 2 * i * Dmax
        buf = buf.at[r:r + dout, :din].set(w.T.astype(jnp.float32))
        buf = buf.at[r + Dmax:r + Dmax + dout, 0].set(
            b.reshape(-1).astype(jnp.float32))
    return buf


# ----------------------------------------------------------------------------
# Fused MLP kernel (transposed: features on sublanes, batch on lanes).
#   h1_T = tanh(W1^T @ x_T + b1)      (Dropout in eval mode == identity)
#   h2_T = tanh(W2^T @ h1_T + b2)
#   o_T  =       W3^T @ h2_T + b3
# ----------------------------------------------------------------------------
def _make_decoder_kernel(n_layers, Dmax, out_rows):
    def kernel(x_ref, p_ref, o_ref):
        h = x_ref[...]                                   # (Dmax, tile_b) bf16
        for i in range(n_layers):
            r = 2 * i * Dmax
            w = p_ref[r:r + Dmax, :].astype(jnp.bfloat16)        # (Dmax, Dmax)
            b = p_ref[r + Dmax:r + 2 * Dmax, 0:1]                # (Dmax, 1) f32
            acc = jnp.dot(w, h, preferred_element_type=jnp.float32) + b
            if i < n_layers - 1:
                h = jnp.tanh(acc).astype(jnp.bfloat16)
            else:
                h = acc                                  # f32, final layer
        o_ref[...] = h[:out_rows, :]
    return kernel


# ----------------------------------------------------------------------------
# Batch (lane) tiling: multiple of 128, <= max_tile, nearly-even split of the
# padded batch; force >= 2 grid steps when there are >= 2 lane-tiles of work
# so megacore (v7x) actually gets fed.
# ----------------------------------------------------------------------------
def _choose_batch_tiling(B, min_tile=128, max_tile=4096):
    units = _cdiv(B, min_tile)
    num_tiles = max(_cdiv(units * min_tile, max_tile), 2 if units >= 2 else 1)
    units_per_tile = _cdiv(units, num_tiles)
    tile_b = units_per_tile * min_tile
    num_tiles = _cdiv(units, units_per_tile)
    pad_b = tile_b * num_tiles
    return tile_b, num_tiles, pad_b


def decoder_forward(x, packed, layersizes, seq_len, n_features, *,
                    max_tile_b=4096):
    """Fused decoder MLP; returns (B, n_features, seq_len) like nn.Unflatten."""
    out_size = seq_len * n_features
    dims, Dmax = _layout_dims(layersizes, out_size)
    n_layers = len(dims) - 1
    out_rows = _round_up(out_size, 8)
    assert packed.shape == (2 * n_layers * Dmax, Dmax), packed.shape

    B, latent = x.shape
    assert latent == layersizes[0]

    tile_b, num_tiles, pad_b = _choose_batch_tiling(B, max_tile=max_tile_b)

    # Lane-dense transposed input slab: features on sublanes (zero-padded to
    # Dmax), batch on lanes (zero-padded to pad_b), bf16 to halve x HBM bytes.
    xt = jnp.zeros((Dmax, pad_b), jnp.bfloat16)
    xt = xt.at[:latent, :B].set(x.T.astype(jnp.bfloat16))

    out_t = pl.pallas_call(
        _make_decoder_kernel(n_layers, Dmax, out_rows),
        out_shape=jax.ShapeDtypeStruct((out_rows, pad_b), jnp.float32),
        grid=(num_tiles,),
        in_specs=[
            # streamed batch tiles of x_T (software pipelined)
            pl.BlockSpec((Dmax, tile_b), lambda i: (0, i)),
            # constant index_map -> parameter buffer DMA'd once, stays resident
            pl.BlockSpec(packed.shape, lambda i: (0, 0)),
        ],
        out_specs=pl.BlockSpec((out_rows, tile_b), lambda i: (0, i)),
        compiler_params=pltpu.CompilerParams(
            dimension_semantics=("parallel",)),
    )(xt, packed)

    flat_t = out_t
    if out_rows != out_size or pad_b != B:
        flat_t = flat_t[:out_size, :B]
    # nn.Unflatten(-1, (n_features, seq_len)); transpose is layout plumbing.
    return flat_t.T.reshape(B, n_features, seq_len)


# ----------------------------------------------------------------------------
# Deterministic PyTorch-Linear-style init: uniform(-1/sqrt(in), +1/sqrt(in)).
# Weights created as (in, out).
# ----------------------------------------------------------------------------
def init_params(key, layersizes, out_size):
    dims = list(layersizes) + [out_size]
    params = []
    for i in range(len(dims) - 1):
        fan_in, fan_out = dims[i], dims[i + 1]
        key, kw, kb = jax.random.split(key, 3)
        bound = 1.0 / jnp.sqrt(jnp.float32(fan_in))
        w = jax.random.uniform(kw, (fan_in, fan_out), jnp.float32, -bound, bound)
        b = jax.random.uniform(kb, (1, fan_out), jnp.float32, -bound, bound)
        params.append((w, b))
    return params


if __name__ == "__main__":
    # Module config: _Decoder(seq_len=8, n_features=4, layersizes=(8, 16, 32),
    #                         dropout_p=0.25, batchnorm=False), eval mode.
    seq_len = 8
    n_features = 4
    layersizes = (8, 16, 32)
    out_size = seq_len * n_features  # 32

    key = jax.random.PRNGKey(0)
    key, kx = jax.random.split(key)

    params = init_params(key, layersizes, out_size)
    packed = pack_params(params, layersizes, out_size)

    def reference(xin):
        # Same math as the kernel: bf16 matmul operands, f32 accumulation,
        # f32 bias/tanh.
        h = xin
        for li, (w, b) in enumerate(params):
            h = jnp.dot(h.astype(jnp.bfloat16), w.astype(jnp.bfloat16),
                        preferred_element_type=jnp.float32) + b
            if li < len(params) - 1:
                h = jnp.tanh(h)
        return h.reshape(h.shape[0], n_features, seq_len)

    # Small batch (primary spec-sized example) + a larger batch that exercises
    # the multi-tile / ragged-padding path.
    for batch in (2, 300):
        kxi = jax.random.fold_in(kx, batch)
        x = jax.random.normal(kxi, (batch, layersizes[0]), dtype=jnp.float32)

        out = decoder_forward(x, packed, layersizes, seq_len, n_features)
        out = jax.block_until_ready(out)

        assert out.shape == (batch, n_features, seq_len), out.shape
        assert out.dtype == jnp.float32

        ref = reference(x)
        err = float(jnp.max(jnp.abs(out - ref)))
        assert jnp.allclose(out, ref, atol=2e-3, rtol=2e-3), (batch, err)

    print("KERNEL_OK")
</pallas_src>

<mosaic_0001>
module attributes {stable_mosaic.version = 11 : i64} {
  func.func @kernel(%arg0: i32, %arg1: memref<32x128xbf16, #tpu.memory_space<vmem>>, %arg2: memref<192x32xf32, #tpu.memory_space<vmem>>, %arg3: memref<32x128xf32, #tpu.memory_space<vmem>>) attributes {dimension_semantics = [#tpu.dimension_semantics<parallel>], iteration_bounds = array<i64: 1>, scalar_prefetch = 0 : i64, scratch_operands = 0 : i64, tpu.core_type = #tpu.core_type<tc>, window_params = [{transform_indices = @transform_0, window_bounds = array<i64: 32, 128>}, {pipeline_mode = #tpu.pipeline_mode<synchronous>, transform_indices = @transform_1, window_bounds = array<i64: 192, 32>}, {transform_indices = @transform_2, window_bounds = array<i64: 32, 128>}]} {
    %c0 = arith.constant 0 : index
    %c0_0 = arith.constant 0 : index
    %0 = vector.load %arg1[%c0, %c0_0] : memref<32x128xbf16, #tpu.memory_space<vmem>>, vector<32x128xbf16>
    %c0_1 = arith.constant 0 : index
    %c0_2 = arith.constant 0 : index
    %1 = vector.load %arg2[%c0_1, %c0_2] : memref<192x32xf32, #tpu.memory_space<vmem>>, vector<32x32xf32>
    %2 = arith.truncf %1 : vector<32x32xf32> to vector<32x32xbf16>
    %c32 = arith.constant 32 : index
    %c0_3 = arith.constant 0 : index
    %3 = vector.load %arg2[%c32, %c0_3] : memref<192x32xf32, #tpu.memory_space<vmem>>, vector<32x1xf32>
    %cst = arith.constant dense<0.000000e+00> : vector<32x128xf32>
    %4 = tpu.matmul %2, %0, %cst {dimension_numbers = #tpu.dot_dimension_numbers<[1], [0], [0], [1], [0, 0, 1, 1], [], []>} : vector<32x32xbf16>, vector<32x128xbf16>, vector<32x128xf32> -> vector<32x128xf32>
    %5 = vector.broadcast %3 : vector<32x1xf32> to vector<32x128xf32>
    %6 = arith.addf %4, %5 : vector<32x128xf32>
    %7 = math.tanh %6 : vector<32x128xf32>
    %8 = arith.truncf %7 : vector<32x128xf32> to vector<32x128xbf16>
    %c64 = arith.constant 64 : index
    %c0_4 = arith.constant 0 : index
    %9 = vector.load %arg2[%c64, %c0_4] : memref<192x32xf32, #tpu.memory_space<vmem>>, vector<32x32xf32>
    %10 = arith.truncf %9 : vector<32x32xf32> to vector<32x32xbf16>
    %c96 = arith.constant 96 : index
    %c0_5 = arith.constant 0 : index
    %11 = vector.load %arg2[%c96, %c0_5] : memref<192x32xf32, #tpu.memory_space<vmem>>, vector<32x1xf32>
    %cst_6 = arith.constant dense<0.000000e+00> : vector<32x128xf32>
    %12 = tpu.matmul %10, %8, %cst_6 {dimension_numbers = #tpu.dot_dimension_numbers<[1], [0], [0], [1], [0, 0, 1, 1], [], []>} : vector<32x32xbf16>, vector<32x128xbf16>, vector<32x128xf32> -> vector<32x128xf32>
    %13 = vector.broadcast %11 : vector<32x1xf32> to vector<32x128xf32>
    %14 = arith.addf %12, %13 : vector<32x128xf32>
    %15 = math.tanh %14 : vector<32x128xf32>
    %16 = arith.truncf %15 : vector<32x128xf32> to vector<32x128xbf16>
    %c128 = arith.constant 128 : index
    %c0_7 = arith.constant 0 : index
    %17 = vector.load %arg2[%c128, %c0_7] : memref<192x32xf32, #tpu.memory_space<vmem>>, vector<32x32xf32>
    %18 = arith.truncf %17 : vector<32x32xf32> to vector<32x32xbf16>
    %c160 = arith.constant 160 : index
    %c0_8 = arith.constant 0 : index
    %19 = vector.load %arg2[%c160, %c0_8] : memref<192x32xf32, #tpu.memory_space<vmem>>, vector<32x1xf32>
    %cst_9 = arith.constant dense<0.000000e+00> : vector<32x128xf32>
    %20 = tpu.matmul %18, %16, %cst_9 {dimension_numbers = #tpu.dot_dimension_numbers<[1], [0], [0], [1], [0, 0, 1, 1], [], []>} : vector<32x32xbf16>, vector<32x128xbf16>, vector<32x128xf32> -> vector<32x128xf32>
    %21 = vector.broadcast %19 : vector<32x1xf32> to vector<32x128xf32>
    %22 = arith.addf %20, %21 : vector<32x128xf32>
    %c0_10 = arith.constant 0 : index
    %c0_11 = arith.constant 0 : index
    %23 = vector.load %arg3[%c0_10, %c0_11] : memref<32x128xf32, #tpu.memory_space<vmem>>, vector<32x128xf32>
    tpu.vector_store %arg3[%c0_10, %c0_11], %22 {strides = array<i32>} : memref<32x128xf32, #tpu.memory_space<vmem>>, vector<32x128xf32>,
    return
  }
  func.func @transform_0(%arg0: i32) -> (i32, i32) {
    %c0_i32 = arith.constant 0 : i32
    %c0_i32_0 = arith.constant 0 : i32
    return %c0_i32, %arg0 : i32, i32
  }
  func.func @transform_1(%arg0: i32) -> (i32, i32) {
    %c0_i32 = arith.constant 0 : i32
    %c0_i32_0 = arith.constant 0 : i32
    %c0_i32_1 = arith.constant 0 : i32
    return %c0_i32, %c0_i32_0 : i32, i32
  }
  func.func @transform_2(%arg0: i32) -> (i32, i32) {
    %c0_i32 = arith.constant 0 : i32
    %c0_i32_0 = arith.constant 0 : i32
    return %c0_i32, %arg0 : i32, i32
  }
}

</mosaic_0001>

<llo_original>
// kernel: tpu_custom_call.1
$region0: #{tpu_custom_call.1}
  #allocation0 [shape = 'u32[]', space=smem, size = 0x4, offset = 0x4, fixed_abs, tag = 'smem constant byte address 0x4 - core index']
  #allocation1 [shape = 'u32[144,128]{1,0:T(1,128)}', space=vmem, size = 0x12000, scoped, tag = 'internal scratch']
  %s0 = inlined_call_operand.vmem [shape: bf16[32,128], index: 0, kind: input, shape index: {}]
  %s1 = inlined_call_operand.vmem [shape: f32[192,32], index: 1, kind: input, shape index: {}]
  %s2 = inlined_call_operand.hbm [shape: f32[32,128], index: 2, kind: output, shape index: {}]
  %s3 = sld [smem:[#allocation0]]
  $region18: #{tpu_custom_call.1} parent=0
    _
  %s5 = ssub.s32 1, %s3
  %s6 = scalar_select 0, %s5, %s3
  $region1: #{tpu_custom_call.1} parent=0
    #allocation2 [shape = 'u8[16384]{0}', space=vmem, size = 0x4000, scoped, tag = 'output window, operand 0, single buffered']
    #allocation3 [shape = 's32[1]{0}', space=sflag, size = 0x4, scoped, tag = 'scoped memory for tpu_custom_call.1']
    %7 = vsyncpa [#allocation3], 0
    // Predicated region
    $region2: #{tpu_custom_call.1} parent=1 // pred_check
      _
    $region3: #{tpu_custom_call.1} parent=1 // pred_check_branch
      %9 = sbr.rel (0) target = $region5
    $region4: #{tpu_custom_call.1} parent=1 // pred_region
      _
    $region5: #{tpu_custom_call.1} parent=1 // pred_fallthru
      _
    // Predicated region
    $region6: #{tpu_custom_call.1} parent=1 // pred_check
      _
    $region7: #{tpu_custom_call.1} parent=1 // pred_check_branch
      %11 = sbr.rel (0) target = $region9
    $region8: #{tpu_custom_call.1} parent=1 // pred_region
      _
    $region9: #{tpu_custom_call.1} parent=1 // pred_fallthru
      _
    %v13 = vld [vmem:[%s0] sm:$0xf]
    %v14 = vld [vmem:[%s0 + $0x4] sm:$0xf]
    %v15 = vld [vmem:[%s0 + $0x8] sm:$0xf]
    %v16 = vld [vmem:[%s0 + $0xc] sm:$0xf]
    %v17 = vld [vmem:[%s1] sm:$0xff]
    %v18 = vld [vmem:[%s1 + $0x8] sm:$0xff]
    %v19 = vld [vmem:[%s1 + $0x10] sm:$0xff]
    %v20 = vld [vmem:[%s1 + $0x18] sm:$0xff]
    %v21 = vpack.c.bf16 %v18, %v17
    %v22 = vpack.c.bf16 %v20, %v19
    %v23 = vld [vmem:[%s1 + $0x20] sm:$0xff]
    %v24 = vld [vmem:[%s1 + $0x28] sm:$0xff]
    %v25 = vld [vmem:[%s1 + $0x30] sm:$0xff]
    %v26 = vld [vmem:[%s1 + $0x38] sm:$0xff]
    %28 = vset.pattern.permute.xlu0 0
    %29 = vperm.xlu0 %28, %v23
    %v30 = vpop.permute.xlu0 %29
    %33 = vset.pattern.permute.xlu0 0
    %34 = vperm.xlu0 %33, %v24
    %v35 = vpop.permute.xlu0 %34
    %38 = vset.pattern.permute.xlu0 0
    %39 = vperm.xlu0 %38, %v25
    %v40 = vpop.permute.xlu0 %39
    %43 = vset.pattern.permute.xlu0 0
    %44 = vperm.xlu0 %43, %v26
    %v45 = vpop.permute.xlu0 %44
    %v51 = vunpack.c.l.b16 %v13
    %v52 = vunpack.c.l.b16 %v14
    %v53 = vunpack.c.l.b16 %v15
    %v54 = vunpack.c.l.b16 %v16
    %v55 = vpack.c.b16 %v52, %v51
    %v56 = vpack.c.b16 %v54, %v53
    %vm59 = vcmask 261120
    %v61 = vsel %vm59, %v21, 0
    %v64 = vsel %vm59, %v22, 0
    %66 = vmatprep.subr.bf16.mxu0 0
    %67 = vmatpush1.bf16.msra.mxu0 %v55
    %68 = vmatprep.subr.bf16.mxu0 0
    %69 = vmatpush1.bf16.msra.mxu0 %v56
    %70 = vmatprep.subr.bf16.mxu0 0
    %71 = vmatpush1.bf16.msra.mxu0 0
    %72 = vmatprep.subr.bf16.mxu0 0
    %73 = vmatpush1.bf16.msra.mxu0 0
    %74 = vmatprep.subr.bf16.mxu0 0
    %75 = vmatpush1.bf16.msra.mxu0 0
    %76 = vmatprep.subr.bf16.mxu0 0
    %77 = vmatpush1.bf16.msra.mxu0 0
    %78 = vmatprep.subr.bf16.mxu0 0
    %79 = vmatpush1.bf16.msra.mxu0 0
    %80 = vmatprep.subr.bf16.mxu0 0
    %81 = vmatpush1.bf16.msra.mxu0 0
    %82 = vmatprep.subr.bf16.mxu0 0
    %83 = vmatpush1.bf16.msra.mxu0 0
    %84 = vmatprep.subr.bf16.mxu0 0
    %85 = vmatpush1.bf16.msra.mxu0 0
    %86 = vmatprep.subr.bf16.mxu0 0
    %87 = vmatpush1.bf16.msra.mxu0 0
    %88 = vmatprep.subr.bf16.mxu0 0
    %89 = vmatpush1.bf16.msra.mxu0 0
    %90 = vmatprep.subr.bf16.mxu0 0
    %91 = vmatpush1.bf16.msra.mxu0 0
    %92 = vmatprep.subr.bf16.mxu0 0
    %93 = vmatpush1.bf16.msra.mxu0 0
    %94 = vmatprep.subr.bf16.mxu0 0
    %95 = vmatpush1.bf16.msra.mxu0 0
    %96 = vmatprep.subr.bf16.mxu0 0
    %97 = vmatpush1.bf16.msra.mxu0 0
    %98 = vmatprep.mubr.bf16.mxu0 0
    %99 = vmatmul.mubr.bf16.gmra.mrb[0].mxu0 %v61
    %v100 = vpop.f32.mrb[0].mxu0
    %v101 = vadd.f32 %v30, %v100
    %v102 = vpop.f32.mrb[0].mxu0
    %v103 = vpop.f32.mrb[0].mxu0
    %v104 = vadd.f32 %v35, %v103
    %v105 = vpop.f32.mrb[0].mxu0
    %106 = vmatprep.mubr.bf16.mxu0 0
    %107 = vmatmul.mubr.bf16.gmra.mrb[0].mxu0 %v64
    %v108 = vpop.f32.mrb[0].mxu0
    %v109 = vadd.f32 %v40, %v108
    %v110 = vpop.f32.mrb[0].mxu0
    %v111 = vpop.f32.mrb[0].mxu0
    %v112 = vadd.f32 %v45, %v111
    %v113 = vpop.f32.mrb[0].mxu0
    %114 = vdwg.mxu0
    %v115 = vtanh.pop %v101
    %v116 = vtanh.pop %v104
    %v117 = vtanh.pop %v109
    %v118 = vtanh.pop %v112
    %v119 = vpack.c.bf16 %v116, %v115
    %v120 = vpack.c.bf16 %v118, %v117
    %v121 = vld [vmem:[%s1 + $0x40] sm:$0xff]
    %v122 = vld [vmem:[%s1 + $0x48] sm:$0xff]
    %v123 = vld [vmem:[%s1 + $0x50] sm:$0xff]
    %v124 = vld [vmem:[%s1 + $0x58] sm:$0xff]
    %v125 = vpack.c.bf16 %v122, %v121
    %v126 = vpack.c.bf16 %v124, %v123
    %v127 = vld [vmem:[%s1 + $0x60] sm:$0xff]
    %v128 = vld [vmem:[%s1 + $0x68] sm:$0xff]
    %v129 = vld [vmem:[%s1 + $0x70] sm:$0xff]
    %v130 = vld [vmem:[%s1 + $0x78] sm:$0xff]
    %132 = vset.pattern.permute.xlu0 0
    %133 = vperm.xlu0 %132, %v127
    %v134 = vpop.permute.xlu0 %133
    %137 = vset.pattern.permute.xlu0 0
    %138 = vperm.xlu0 %137, %v128
    %v139 = vpop.permute.xlu0 %138
    %142 = vset.pattern.permute.xlu0 0
    %143 = vperm.xlu0 %142, %v129
    %v144 = vpop.permute.xlu0 %143
    %147 = vset.pattern.permute.xlu0 0
    %148 = vperm.xlu0 %147, %v130
    %v149 = vpop.permute.xlu0 %148
    %v152 = vsel %vm59, %v125, 0
    %v155 = vsel %vm59, %v126, 0
    %157 = vmatprep.subr.bf16.mxu0 0
    %158 = vmatpush1.bf16.msra.mxu0 %v119
    %159 = vmatprep.subr.bf16.mxu0 0
    %160 = vmatpush1.bf16.msra.mxu0 %v120
    %161 = vmatprep.subr.bf16.mxu0 0
    %162 = vmatpush1.bf16.msra.mxu0 0
    %163 = vmatprep.subr.bf16.mxu0 0
    %164 = vmatpush1.bf16.msra.mxu0 0
    %165 = vmatprep.subr.bf16.mxu0 0
    %166 = vmatpush1.bf16.msra.mxu0 0
    %167 = vmatprep.subr.bf16.mxu0 0
    %168 = vmatpush1.bf16.msra.mxu0 0
    %169 = vmatprep.subr.bf16.mxu0 0
    %170 = vmatpush1.bf16.msra.mxu0 0
    %171 = vmatprep.subr.bf16.mxu0 0
    %172 = vmatpush1.bf16.msra.mxu0 0
    %173 = vmatprep.subr.bf16.mxu0 0
    %174 = vmatpush1.bf16.msra.mxu0 0
    %175 = vmatprep.subr.bf16.mxu0 0
    %176 = vmatpush1.bf16.msra.mxu0 0
    %177 = vmatprep.subr.bf16.mxu0 0
    %178 = vmatpush1.bf16.msra.mxu0 0
    %179 = vmatprep.subr.bf16.mxu0 0
    %180 = vmatpush1.bf16.msra.mxu0 0
    %181 = vmatprep.subr.bf16.mxu0 0
    %182 = vmatpush1.bf16.msra.mxu0 0
    %183 = vmatprep.subr.bf16.mxu0 0
    %184 = vmatpush1.bf16.msra.mxu0 0
    %185 = vmatprep.subr.bf16.mxu0 0
    %186 = vmatpush1.bf16.msra.mxu0 0
    %187 = vmatprep.subr.bf16.mxu0 0
    %188 = vmatpush1.bf16.msra.mxu0 0
    %189 = vmatprep.mubr.bf16.mxu0 0
    %190 = vmatmul.mubr.bf16.gmra.mrb[0].mxu0 %v152
    %v191 = vpop.f32.mrb[0].mxu0
    %v192 = vadd.f32 %v134, %v191
    %v193 = vpop.f32.mrb[0].mxu0
    %v194 = vpop.f32.mrb[0].mxu0
    %v195 = vadd.f32 %v139, %v194
    %v196 = vpop.f32.mrb[0].mxu0
    %197 = vmatprep.mubr.bf16.mxu0 0
    %198 = vmatmul.mubr.bf16.gmra.mrb[0].mxu0 %v155
    %v199 = vpop.f32.mrb[0].mxu0
    %v200 = vadd.f32 %v144, %v199
    %v201 = vpop.f32.mrb[0].mxu0
    %v202 = vpop.f32.mrb[0].mxu0
    %v203 = vadd.f32 %v149, %v202
    %v204 = vpop.f32.mrb[0].mxu0
    %205 = vdwg.mxu0
    %v206 = vtanh.pop %v192
    %v207 = vtanh.pop %v195
    %v208 = vtanh.pop %v200
    %v209 = vtanh.pop %v203
    %v210 = vpack.c.bf16 %v207, %v206
    %v211 = vpack.c.bf16 %v209, %v208
    %v212 = vld [vmem:[%s1 + $0x80] sm:$0xff]
    %v213 = vld [vmem:[%s1 + $0x88] sm:$0xff]
    %v214 = vld [vmem:[%s1 + $0x90] sm:$0xff]
    %v215 = vld [vmem:[%s1 + $0x98] sm:$0xff]
    %v216 = vpack.c.bf16 %v213, %v212
    %v217 = vpack.c.bf16 %v215, %v214
    %v218 = vld [vmem:[%s1 + $0xa0] sm:$0xff]
    %v219 = vld [vmem:[%s1 + $0xa8] sm:$0xff]
    %v220 = vld [vmem:[%s1 + $0xb0] sm:$0xff]
    %v221 = vld [vmem:[%s1 + $0xb8] sm:$0xff]
    %223 = vset.pattern.permute.xlu0 0
    %224 = vperm.xlu0 %223, %v218
    %v225 = vpop.permute.xlu0 %224
    %228 = vset.pattern.permute.xlu0 0
    %229 = vperm.xlu0 %228, %v219
    %v230 = vpop.permute.xlu0 %229
    %233 = vset.pattern.permute.xlu0 0
    %234 = vperm.xlu0 %233, %v220
    %v235 = vpop.permute.xlu0 %234
    %238 = vset.pattern.permute.xlu0 0
    %239 = vperm.xlu0 %238, %v221
    %v240 = vpop.permute.xlu0 %239
    %v243 = vsel %vm59, %v216, 0
    %v246 = vsel %vm59, %v217, 0
    %248 = vmatprep.subr.bf16.mxu0 0
    %249 = vmatpush1.bf16.msra.mxu0 %v210
    %250 = vmatprep.subr.bf16.mxu0 0
    %251 = vmatpush1.bf16.msra.mxu0 %v211
    %252 = vmatprep.subr.bf16.mxu0 0
    %253 = vmatpush1.bf16.msra.mxu0 0
    %254 = vmatprep.subr.bf16.mxu0 0
    %255 = vmatpush1.bf16.msra.mxu0 0
    %256 = vmatprep.subr.bf16.mxu0 0
    %257 = vmatpush1.bf16.msra.mxu0 0
    %258 = vmatprep.subr.bf16.mxu0 0
    %259 = vmatpush1.bf16.msra.mxu0 0
    %260 = vmatprep.subr.bf16.mxu0 0
    %261 = vmatpush1.bf16.msra.mxu0 0
    %262 = vmatprep.subr.bf16.mxu0 0
    %263 = vmatpush1.bf16.msra.mxu0 0
    %264 = vmatprep.subr.bf16.mxu0 0
    %265 = vmatpush1.bf16.msra.mxu0 0
    %266 = vmatprep.subr.bf16.mxu0 0
    %267 = vmatpush1.bf16.msra.mxu0 0
    %268 = vmatprep.subr.bf16.mxu0 0
    %269 = vmatpush1.bf16.msra.mxu0 0
    %270 = vmatprep.subr.bf16.mxu0 0
    %271 = vmatpush1.bf16.msra.mxu0 0
    %272 = vmatprep.subr.bf16.mxu0 0
    %273 = vmatpush1.bf16.msra.mxu0 0
    %274 = vmatprep.subr.bf16.mxu0 0
    %275 = vmatpush1.bf16.msra.mxu0 0
    %276 = vmatprep.subr.bf16.mxu0 0
    %277 = vmatpush1.bf16.msra.mxu0 0
    %278 = vmatprep.subr.bf16.mxu0 0
    %279 = vmatpush1.bf16.msra.mxu0 0
    %280 = vmatprep.mubr.bf16.mxu0 0
    %281 = vmatmul.mubr.bf16.gmra.mrb[0].mxu0 %v243
    %v282 = vpop.f32.mrb[0].mxu0
    %v283 = vadd.f32 %v225, %v282
    %v284 = vpop.f32.mrb[0].mxu0
    %v285 = vpop.f32.mrb[0].mxu0
    %v286 = vadd.f32 %v230, %v285
    %v287 = vpop.f32.mrb[0].mxu0
    %288 = vmatprep.mubr.bf16.mxu0 0
    %289 = vmatmul.mubr.bf16.gmra.mrb[0].mxu0 %v246
    %v290 = vpop.f32.mrb[0].mxu0
    %v291 = vadd.f32 %v235, %v290
    %v292 = vpop.f32.mrb[0].mxu0
    %v293 = vpop.f32.mrb[0].mxu0
    %v294 = vadd.f32 %v240, %v293
    %v295 = vpop.f32.mrb[0].mxu0
    %296 = vdwg.mxu0
    %297 = vst [vmem:[#allocation2] sm:$0xff] %v283
    %298 = vst [vmem:[#allocation2 + $0x8] sm:$0xff] %v286
    %299 = vst [vmem:[#allocation2 + $0x10] sm:$0xff] %v291
    %300 = vst [vmem:[#allocation2 + $0x18] sm:$0xff] %v294
    // Predicated region
    $region10: #{tpu_custom_call.1} parent=1 // pred_check
      _
    $region11: #{tpu_custom_call.1} parent=1 // pred_check_branch
      %302 = sbr.rel (0) target = $region13
    $region12: #{tpu_custom_call.1} parent=1 // pred_region
      %s304 = ssub.s32 512, 512
      %305 = vsyncadd [#allocation3], %s304
      %s306 = sshll.u32 [#allocation2], 4
      %s307 = int_to_ptr.vmem [resolvable:$true] %s306
      %312 = dma.vmem_to_hbm [thread:$0]  %s307, 512, %s2, [#allocation3], 128, 128, 8
    $region13: #{tpu_custom_call.1} parent=1 // pred_fallthru
      _
    // Predicated region
    $region14: #{tpu_custom_call.1} parent=1 // pred_check
      _
    $region15: #{tpu_custom_call.1} parent=1 // pred_check_branch
      %314 = sbr.rel (0) target = $region17
    $region16: #{tpu_custom_call.1} parent=1 // pred_region
      %315 = dma.done [#allocation3], 512
    $region17: #{tpu_custom_call.1} parent=1 // pred_fallthru
      _
    %316 = vsyncpa [#allocation3], 1

</llo_original>
